<compile_context>
chip_gen: v6e
topology: v6e:2x2x1
jax: 0.10.0
libtpu: 0.0.40
codegen_flags: <defaults>
</compile_context>

<pallas_src>
import functools

import numpy as np

import jax
import jax.numpy as jnp
from jax import lax
from jax.experimental import pallas as pl
from jax.experimental.pallas import tpu as pltpu


LANES = 128        # lane width of the packed weight slab
ALIGN = 16         # bf16 sublane packing: keep every slab block 16-row aligned
BIAS_ROWS = ALIGN  # each bias occupies a 16-row block (row 0 = bias)


def _round_up(n, m):
    return ((n + m - 1) // m) * m


def _cdiv(a, b):
    return (a + b - 1) // b


# ---------------------------------------------------------------------------
# One-time parameter packing (hoists all transposes / fusions out of forward)
# ---------------------------------------------------------------------------
def _pt(params, name):
    """PyTorch layout W[out,in], b[out]  ->  W^T [in,out], b[out]  (numpy f32)."""
    w = np.asarray(params[name + "_w"], dtype=np.float32).T
    b = np.asarray(params[name + "_b"], dtype=np.float32)
    return w, b


def pack_critic_target_params(params, *, num_layer, dueling):
    """Build (slab [R,128] bf16, meta) once.

    The slab holds, per effective layer, a zero-padded [k_store, 128] weight
    block followed by a 16-row bias block (row 0 = bias).  Layers fed by the
    padded [B,128] activation store a full 128-row K so the kernel never has
    to lane-slice activations before a matmul.
    """
    if num_layer == 3 and dueling == 1:
        # TODO(synk): PyTorch branch references undefined self.N -> unconstructible.
        raise NotImplementedError("num_layer==3 with dueling==1 is ill-defined in the spec")

    w1, b1 = _pt(params, "fc1")
    state_dim, h1 = w1.shape
    pad_sd = _round_up(state_dim, ALIGN)
    assert h1 <= LANES, "hidden_size1 > 128 lanes not supported by this kernel"

    if num_layer == 2:
        w2, b2 = _pt(params, "fc2")
        h2 = w2.shape[1]
        if dueling == 1:
            w2a, b2a = _pt(params, "fc2_adv")
            w3, b3 = _pt(params, "fc3")          # [h2, 1]   (value head)
            w3a, b3a = _pt(params, "fc3_adv")    # [h2, A]   (advantage head)
            A = w3a.shape[1]
            assert 2 * h2 <= LANES and A + 1 <= LANES
            # fused second layer: x1 @ [W2 | W2_adv]
            w2cat = np.concatenate([w2, w2a], axis=1)            # [h1, 2*h2]
            b2cat = np.concatenate([b2, b2a], axis=0)            # [2*h2]
            # block-diagonal third layer: advantage -> lanes [0,A), value -> lane A,
            # so the q-values land lane-dense starting at lane 0.
            w3blk = np.zeros((2 * h2, A + 1), np.float32)
            w3blk[:h2, A:A + 1] = w3
            w3blk[h2:, :A] = w3a
            b3blk = np.zeros((A + 1,), np.float32)
            b3blk[:A] = b3a
            b3blk[A] = b3[0]
            layers_np = [(w1, b1, True, pad_sd),
                         (w2cat, b2cat, True, LANES),
                         (w3blk, b3blk, False, LANES)]
            num_action = A
        else:
            w3, b3 = _pt(params, "fc3")
            A = w3.shape[1]
            assert h2 <= LANES and A <= LANES
            layers_np = [(w1, b1, True, pad_sd),
                         (w2, b2, True, LANES),
                         (w3, b3, False, LANES)]
            num_action = A
    elif num_layer == 3:
        w2, b2 = _pt(params, "fc2")
        w3, b3 = _pt(params, "fc3")
        w4, b4 = _pt(params, "fc4")
        A = w4.shape[1]
        assert max(w2.shape[1], w3.shape[1], A) <= LANES
        layers_np = [(w1, b1, True, pad_sd),
                     (w2, b2, True, LANES),
                     (w3, b3, True, LANES),
                     (w4, b4, False, LANES)]
        num_action = A
    else:
        raise NotImplementedError(f"num_layer={num_layer}")

    blocks, layer_meta, row = [], [], 0
    for (w, b, relu, k_feed) in layers_np:
        k, n = w.shape
        k_store = max(_round_up(k, ALIGN), k_feed)
        wblk = np.zeros((k_store, LANES), np.float32)
        wblk[:k, :n] = w
        bblk = np.zeros((BIAS_ROWS, LANES), np.float32)
        bblk[0, :n] = b
        blocks += [wblk, bblk]
        layer_meta.append((row, k_feed, row + k_store, relu))
        row += k_store + BIAS_ROWS

    # bf16 slab: single-pass MXU operands, half the DMA / VMEM footprint.
    slab = jnp.asarray(np.concatenate(blocks, axis=0), dtype=jnp.bfloat16)  # [R, 128]
    meta = dict(layers=tuple(layer_meta),
                dueling=(dueling == 1),
                num_action=num_action,
                state_dim=state_dim,
                pad_sd=pad_sd)
    return slab, meta


# ---------------------------------------------------------------------------
# Kernel: whole MLP (optionally fused-dueling) on one packed bf16 weight slab
# ---------------------------------------------------------------------------
def _mlp_slab_kernel(s_ref, slab_ref, out_ref, *, layers, dueling, num_action):
    x = s_ref[...].astype(jnp.float32)                  # [B, pad_sd] f32
    for (w_off, k, b_off, relu) in layers:              # static Python unroll
        w = slab_ref[w_off:w_off + k, :]                # bf16 [k, 128] (zero padded)
        b = slab_ref[b_off:b_off + 1, :].astype(jnp.float32)   # f32 [1, 128]
        # bf16 x bf16 -> f32 accumulate: one deterministic MXU pass per layer.
        x = jnp.dot(x.astype(jnp.bfloat16), w,
                    preferred_element_type=jnp.float32) + b
        if relu:
            x = jnp.maximum(x, 0.0)
    # x: [B, 128]; only the leading columns are meaningful.
    if dueling:
        a = num_action
        lane = lax.broadcasted_iota(jnp.int32, x.shape, 1)
        adv = jnp.where(lane < a, x, 0.0)               # advantage lanes [0, a)
        # PyTorch uses x3_adv.mean() over ALL elements (batch x actions).
        mean_adv = jnp.sum(adv) / (x.shape[0] * a)
        v = x[:, a:a + 1]                               # value head packed at lane `a`
        x = x + v - mean_adv                            # lanes [0, a) hold the q-values
    # Lane-dense store: full [B,128] slab, wrapper slices [:, :num_action].
    out_ref[...] = x.astype(out_ref.dtype)


# ---------------------------------------------------------------------------
# Forward factory
# ---------------------------------------------------------------------------
def make_critic_target_forward(meta, *, batch_tile=2048,
                               single_block_max_bytes=12 * 1024 * 1024):
    layers = meta["layers"]
    dueling = meta["dueling"]
    num_action = meta["num_action"]
    pad_sd = meta["pad_sd"]

    kernel = functools.partial(_mlp_slab_kernel, layers=layers,
                               dueling=dueling, num_action=num_action)
    vmem_whole = pl.BlockSpec(memory_space=pltpu.MemorySpace.VMEM)

    # v7x has 2 TensorCores: prefer the (even-length) grid path earlier there.
    try:
        multi_tc = "v7" in jax.devices()[0].device_kind.lower()
    except Exception:  # pragma: no cover
        multi_tc = False

    @jax.jit
    def forward(state, slab):
        B = state.shape[0]
        if state.shape[1] != pad_sd:                     # align fc1's K to the slab layout
            state = jnp.pad(state, ((0, 0), (0, pad_sd - state.shape[1])))

        slab_bytes = slab.size * slab.dtype.itemsize
        # rough single-block VMEM estimate: state + output + f32 activations + slab
        est_single = 4 * B * (pad_sd + 3 * LANES) + slab_bytes

        use_grid = (not dueling) and (
            est_single > single_block_max_bytes
            or (multi_tc and B >= 2 * batch_tile))

        if use_grid:
            # Large non-dueling batches: big tiles, even grid (>= 2) so v7x
            # megacore splits evenly; ragged batches are padded, not demoted.
            n_tiles = max(2, _cdiv(B, batch_tile))
            if n_tiles % 2:
                n_tiles += 1
            tile = _round_up(_cdiv(B, n_tiles), 8)
            Bp = n_tiles * tile
            if Bp != B:
                state = jnp.pad(state, ((0, Bp - B), (0, 0)))
            out = pl.pallas_call(
                kernel,
                out_shape=jax.ShapeDtypeStruct((Bp, LANES), jnp.float32),
                grid=(n_tiles,),
                in_specs=[
                    pl.BlockSpec((tile, pad_sd), lambda i: (i, 0)),
                    # Constant index_map: the bf16 weight slab stays VMEM-resident.
                    pl.BlockSpec(slab.shape, lambda i: (0, 0)),
                ],
                out_specs=pl.BlockSpec((tile, LANES), lambda i: (i, 0)),
                compiler_params=pltpu.CompilerParams(
                    dimension_semantics=("parallel",)),
            )(state, slab)
            return out[:B, :num_action]

        # Single-block path: no grid scaffolding, everything pinned in VMEM.
        comp = None
        if est_single > single_block_max_bytes:
            # Only reachable by the dueling head (global batch mean -> cannot be
            # batch-tiled as written): raise the scoped-VMEM ceiling (bounded).
            # TODO(synk): two-pass tiled dueling reduction for batches whose
            # activations exceed ~56 MiB (v7x physical VMEM minus headroom).
            comp = pltpu.CompilerParams(
                vmem_limit_bytes=min(max(int(2.5 * est_single), 32 * 1024 * 1024),
                                     56 * 1024 * 1024))
        out = pl.pallas_call(
            kernel,
            out_shape=jax.ShapeDtypeStruct((B, LANES), jnp.float32),
            in_specs=[vmem_whole, vmem_whole],
            out_specs=vmem_whole,
            compiler_params=comp,
        )(state, slab)
        return out[:, :num_action]

    return forward


# ---------------------------------------------------------------------------
# Deterministic parameter init (PyTorch nn.Linear-style uniform fan-in bound)
# ---------------------------------------------------------------------------
def _init_linear(key, in_dim, out_dim):
    kw, kb = jax.random.split(key)
    bound = 1.0 / jnp.sqrt(in_dim)
    w = jax.random.uniform(kw, (out_dim, in_dim), jnp.float32, -bound, bound)
    b = jax.random.uniform(kb, (out_dim,), jnp.float32, -bound, bound)
    return w, b


def make_params(key, state_dim, num_action, h1, h2, h3, num_layer, dueling):
    if num_layer == 2:
        names = [("fc1", state_dim, h1), ("fc2", h1, h2)]
        if dueling == 1:
            names += [("fc3", h2, 1), ("fc2_adv", h1, h2), ("fc3_adv", h2, num_action)]
        else:
            names += [("fc3", h2, num_action)]
    elif num_layer == 3:
        names = [("fc1", state_dim, h1), ("fc2", h1, h2), ("fc3", h2, h3),
                 ("fc4", h3, num_action)]
    else:
        raise NotImplementedError(num_layer)
    params = {}
    for k, (name, din, dout) in zip(jax.random.split(key, len(names)), names):
        w, b = _init_linear(k, din, dout)
        params[name + "_w"] = w
        params[name + "_b"] = b
    return params


# Pure-JAX reference (mirrors the PyTorch forward) for correctness checking.
# matmul_dtype=bfloat16 reproduces the kernel's pinned MXU precision exactly.
def _ref_forward(state, params, num_layer, dueling, matmul_dtype=jnp.float32):
    def lin(x, n):
        w = params[n + "_w"].T.astype(matmul_dtype)
        b = params[n + "_b"].astype(matmul_dtype).astype(jnp.float32)
        return jnp.dot(x.astype(matmul_dtype), w,
                       preferred_element_type=jnp.float32) + b
    x1 = jax.nn.relu(lin(state, "fc1"))
    x2 = jax.nn.relu(lin(x1, "fc2"))
    if num_layer == 2:
        if dueling == 1:
            x2a = jax.nn.relu(lin(x1, "fc2_adv"))
            x3a = lin(x2a, "fc3_adv")
            x3 = lin(x2, "fc3")
            return x3 + x3a - x3a.mean()
        return lin(x2, "fc3")
    x3 = jax.nn.relu(lin(x2, "fc3"))
    return lin(x3, "fc4")


# ---------------------------------------------------------------------------
if __name__ == "__main__":
    key = jax.random.PRNGKey(0)

    configs = [
        # (B,   state_dim, A, h1, h2, h3, num_layer, dueling, forward_kwargs)
        (8,     16,        8, 32, 32, 32, 2,         1, {}),       # fused dueling head (single block)
        (8,     16,        8, 32, 32, 32, 3,         0, {}),       # 3-layer chain (single block)
        (1024,  16,        8, 32, 32, 32, 2,         0,            # force the tiled / even-grid path
         dict(batch_tile=512, single_block_max_bytes=64 * 1024)),
        (1000,  16,        8, 32, 32, 32, 2,         0,            # ragged batch -> padded grid path
         dict(batch_tile=512, single_block_max_bytes=64 * 1024)),
    ]

    for idx, (B, sd, A, h1, h2, h3, nl, du, fkw) in enumerate(configs):
        kp, ks, key = jax.random.split(key, 3)
        params = make_params(kp, sd, A, h1, h2, h3, nl, du)
        state = jax.random.normal(ks, (B, sd), jnp.float32)

        slab, meta = pack_critic_target_params(params, num_layer=nl, dueling=du)
        forward = make_critic_target_forward(meta, **fkw)

        out = jax.block_until_ready(forward(state, slab))
        ref_bf16 = _ref_forward(state, params, nl, du, matmul_dtype=jnp.bfloat16)
        ref_f32 = _ref_forward(state, params, nl, du)

        assert out.shape == (B, A), f"config {idx}: bad shape {out.shape}"
        assert jnp.allclose(out, ref_bf16, atol=1e-3, rtol=1e-3), \
            f"config {idx}: mismatch vs bf16-precision reference"
        assert jnp.allclose(out, ref_f32, atol=1e-1, rtol=1e-1), \
            f"config {idx}: drifted too far from f32 reference"

    print("KERNEL_OK")
</pallas_src>

<mosaic_0001>
module attributes {stable_mosaic.version = 11 : i64} {
  func.func @_mlp_slab_kernel(%arg0: memref<8x16xf32, #tpu.memory_space<vmem>>, %arg1: memref<320x128xbf16, #tpu.memory_space<vmem>>, %arg2: memref<8x128xf32, #tpu.memory_space<vmem>>) attributes {dimension_semantics = [], scalar_prefetch = 0 : i64, scratch_operands = 0 : i64, tpu.core_type = #tpu.core_type<tc>} {
    %c0 = arith.constant 0 : index
    %c0_0 = arith.constant 0 : index
    %0 = vector.load %arg0[%c0, %c0_0] : memref<8x16xf32, #tpu.memory_space<vmem>>, vector<8x16xf32>
    %c0_1 = arith.constant 0 : index
    %c0_2 = arith.constant 0 : index
    %1 = vector.load %arg1[%c0_1, %c0_2] : memref<320x128xbf16, #tpu.memory_space<vmem>>, vector<16x128xbf16>
    %c16 = arith.constant 16 : index
    %c0_3 = arith.constant 0 : index
    %2 = vector.load %arg1[%c16, %c0_3] : memref<320x128xbf16, #tpu.memory_space<vmem>>, vector<1x128xbf16>
    %3 = arith.extf %2 : vector<1x128xbf16> to vector<1x128xf32>
    %4 = arith.truncf %0 : vector<8x16xf32> to vector<8x16xbf16>
    %cst = arith.constant dense<0.000000e+00> : vector<8x128xf32>
    %5 = tpu.matmul %4, %1, %cst {dimension_numbers = #tpu.dot_dimension_numbers<[1], [0], [0], [1], [0, 0, 1, 1], [], []>} : vector<8x16xbf16>, vector<16x128xbf16>, vector<8x128xf32> -> vector<8x128xf32>
    %6 = vector.broadcast %3 : vector<1x128xf32> to vector<8x128xf32>
    %7 = arith.addf %5, %6 : vector<8x128xf32>
    %cst_4 = arith.constant 0.000000e+00 : f32
    %8 = vector.broadcast %cst_4 : f32 to vector<8x128xf32>
    %9 = arith.maximumf %7, %8 : vector<8x128xf32>
    %c32 = arith.constant 32 : index
    %c0_5 = arith.constant 0 : index
    %10 = vector.load %arg1[%c32, %c0_5] : memref<320x128xbf16, #tpu.memory_space<vmem>>, vector<128x128xbf16>
    %c160 = arith.constant 160 : index
    %c0_6 = arith.constant 0 : index
    %11 = vector.load %arg1[%c160, %c0_6] : memref<320x128xbf16, #tpu.memory_space<vmem>>, vector<1x128xbf16>
    %12 = arith.extf %11 : vector<1x128xbf16> to vector<1x128xf32>
    %13 = arith.truncf %9 : vector<8x128xf32> to vector<8x128xbf16>
    %cst_7 = arith.constant dense<0.000000e+00> : vector<8x128xf32>
    %14 = tpu.matmul %13, %10, %cst_7 {dimension_numbers = #tpu.dot_dimension_numbers<[1], [0], [0], [1], [0, 0, 1, 1], [], []>} : vector<8x128xbf16>, vector<128x128xbf16>, vector<8x128xf32> -> vector<8x128xf32>
    %15 = vector.broadcast %12 : vector<1x128xf32> to vector<8x128xf32>
    %16 = arith.addf %14, %15 : vector<8x128xf32>
    %cst_8 = arith.constant 0.000000e+00 : f32
    %17 = vector.broadcast %cst_8 : f32 to vector<8x128xf32>
    %18 = arith.maximumf %16, %17 : vector<8x128xf32>
    %c176 = arith.constant 176 : index
    %c0_9 = arith.constant 0 : index
    %19 = vector.load %arg1[%c176, %c0_9] : memref<320x128xbf16, #tpu.memory_space<vmem>>, vector<128x128xbf16>
    %c304 = arith.constant 304 : index
    %c0_10 = arith.constant 0 : index
    %20 = vector.load %arg1[%c304, %c0_10] : memref<320x128xbf16, #tpu.memory_space<vmem>>, vector<1x128xbf16>
    %21 = arith.extf %20 : vector<1x128xbf16> to vector<1x128xf32>
    %22 = arith.truncf %18 : vector<8x128xf32> to vector<8x128xbf16>
    %cst_11 = arith.constant dense<0.000000e+00> : vector<8x128xf32>
    %23 = tpu.matmul %22, %19, %cst_11 {dimension_numbers = #tpu.dot_dimension_numbers<[1], [0], [0], [1], [0, 0, 1, 1], [], []>} : vector<8x128xbf16>, vector<128x128xbf16>, vector<8x128xf32> -> vector<8x128xf32>
    %24 = vector.broadcast %21 : vector<1x128xf32> to vector<8x128xf32>
    %25 = arith.addf %23, %24 : vector<8x128xf32>
    %26 = tpu.iota {dimensions = array<i32: 1>} : vector<8x128xi32>
    %c8_i32 = arith.constant 8 : i32
    %27 = vector.broadcast %c8_i32 : i32 to vector<8x128xi32>
    %28 = arith.cmpi slt, %26, %27 : vector<8x128xi32>
    %cst_12 = arith.constant 0.000000e+00 : f32
    %29 = vector.broadcast %cst_12 : f32 to vector<8x128xf32>
    %30 = arith.select %28, %25, %29 : vector<8x128xi1>, vector<8x128xf32>
    %31 = vector.shape_cast %30 : vector<8x128xf32> to vector<1x8x128xf32>
    %cst_13 = arith.constant dense<0.000000e+00> : vector<1xf32>
    %32 = vector.multi_reduction <add>, %31, %cst_13 [1, 2] : vector<1x8x128xf32> to vector<1xf32>
    %33 = vector.shape_cast %32 : vector<1xf32> to vector<1x1x1xf32>
    %34 = vector.extract %33[0, 0, 0] : f32 from vector<1x1x1xf32>
    %cst_14 = arith.constant 6.400000e+01 : f32
    %35 = arith.divf %34, %cst_14 : f32
    %36 = vector.extract_strided_slice %25 {offsets = [0, 8], sizes = [8, 1], strides = [1, 1]} : vector<8x128xf32> to vector<8x1xf32>
    %37 = vector.broadcast %36 : vector<8x1xf32> to vector<8x128xf32>
    %38 = arith.addf %25, %37 : vector<8x128xf32>
    %39 = vector.broadcast %35 : f32 to vector<8x128xf32>
    %40 = arith.subf %38, %39 : vector<8x128xf32>
    %c0_15 = arith.constant 0 : index
    %c0_16 = arith.constant 0 : index
    %41 = vector.load %arg2[%c0_15, %c0_16] : memref<8x128xf32, #tpu.memory_space<vmem>>, vector<8x128xf32>
    tpu.vector_store %arg2[%c0_15, %c0_16], %40 {strides = array<i32>} : memref<8x128xf32, #tpu.memory_space<vmem>>, vector<8x128xf32>,
    return
  }
}

</mosaic_0001>

<llo_original>
// kernel: forward.1
$region0: #{forward.1}
  #allocation0 [shape = 'u32[]', space=smem, size = 0x4, offset = 0x4, fixed_abs, tag = 'smem constant byte address 0x4 - core index']
  #allocation1 [shape = 'u32[144,128]{1,0:T(1,128)}', space=vmem, size = 0x12000, scoped, tag = 'internal scratch']
  %s0 = inlined_call_operand.hbm [shape: f32[8,16], index: 0, kind: input, shape index: {}]
  %s1 = inlined_call_operand.hbm [shape: bf16[320,128], index: 1, kind: input, shape index: {}]
  %s2 = inlined_call_operand.hbm [shape: f32[8,128], index: 2, kind: output, shape index: {}]
  %s3 = sld [smem:[#allocation0]]
  $region26: #{forward.1} parent=0
    _
  %s5 = ssub.s32 1, %s3
  %s6 = scalar_select 0, %s5, %s3
  $region1: #{forward.1} parent=0
    #allocation2 [shape = 'u8[4096]{0}', space=vmem, size = 0x1000, scoped, tag = 'input window, operand 0, single buffered']
    #allocation3 [shape = 's32[1]{0}', space=sflag, size = 0x4, scoped, tag = 'scoped memory for forward.1']
    #allocation4 [shape = 's32[1]{0}', space=sflag, size = 0x4, scoped, tag = 'scoped memory for forward.1']
    #allocation5 [shape = 'u8[81920]{0}', space=vmem, size = 0x14000, scoped, tag = 'input window, operand 1, single buffered']
    #allocation6 [shape = 's32[1]{0}', space=sflag, size = 0x4, scoped, tag = 'scoped memory for forward.1']
    #allocation7 [shape = 'u8[4096]{0}', space=vmem, size = 0x1000, scoped, tag = 'output window, operand 0, single buffered']
    %7 = vsyncpa [#allocation3], 0
    %8 = vsyncpa [#allocation6], 0
    %9 = vsyncpa [#allocation4], 0
    // Predicated region
    $region2: #{forward.1} parent=1 // pred_check
      _
    $region3: #{forward.1} parent=1 // pred_check_branch
      %11 = sbr.rel (0) target = $region5
    $region4: #{forward.1} parent=1 // pred_region
      %s13 = ssub.s32 128, 128
      %14 = vsyncadd [#allocation3], %s13
      %s16 = sshll.u32 [#allocation2], 4
      %s17 = int_to_ptr.vmem [resolvable:$true] %s16
      %19 = dma.hbm_to_vmem [thread:$0]  %s0, 128, %s17, [#allocation3]
    $region5: #{forward.1} parent=1 // pred_fallthru
      _
    // Predicated region
    $region6: #{forward.1} parent=1 // pred_check
      _
    $region7: #{forward.1} parent=1 // pred_check_branch
      %21 = sbr.rel (0) target = $region9
    $region8: #{forward.1} parent=1 // pred_region
      %s23 = ssub.s32 2560, 2560
      %24 = vsyncadd [#allocation6], %s23
      %s25 = sshll.u32 [#allocation5], 4
      %s26 = int_to_ptr.vmem [resolvable:$true] %s25
      %31 = dma.hbm_to_vmem [thread:$0]  %s1, 2560, %s26, [#allocation6], 64, 64, 4
    $region9: #{forward.1} parent=1 // pred_fallthru
      _
    // Predicated region
    $region10: #{forward.1} parent=1 // pred_check
      _
    $region11: #{forward.1} parent=1 // pred_check_branch
      %33 = sbr.rel (0) target = $region13
    $region12: #{forward.1} parent=1 // pred_region
      %34 = dma.done [#allocation3], 128
    $region13: #{forward.1} parent=1 // pred_fallthru
      _
    // Predicated region
    $region14: #{forward.1} parent=1 // pred_check
      _
    $region15: #{forward.1} parent=1 // pred_check_branch
      %36 = sbr.rel (0) target = $region17
    $region16: #{forward.1} parent=1 // pred_region
      %37 = dma.done [#allocation6], 2560
    $region17: #{forward.1} parent=1 // pred_fallthru
      _
    %v39 = vld [vmem:[#allocation2] sm:$0xff]
    %v40 = vld [vmem:[#allocation5] sm:$0xf]
    %v41 = vld [vmem:[#allocation5 + $0x4] sm:$0xf]
    %v42 = vld [vmem:[#allocation5 + $0x8] sm:$0x1]
    %v43 = vunpack.c.l.bf16 %v42
    %v44 = vpack.c.bf16 %v39, %v39
    %v45 = vlaneseq
    %v46 = vshrl.u32 %v45, 7
    %v47 = vsub.s32 0, %v46
    %v48 = vrot.slane %v43, %v47
    %v51 = vunpack.c.l.b16 %v40
    %v52 = vunpack.c.l.b16 %v41
    %v53 = vpack.c.b16 %v52, %v51
    %vm55 = vcmask 130048
    %v57 = vsel %vm55, %v44, 0
    %59 = vmatprep.subr.bf16.mxu0 0
    %60 = vmatpush1.bf16.msra.mxu0 0
    %61 = vmatprep.subr.bf16.mxu0 0
    %62 = vmatpush1.bf16.msra.mxu0 0
    %63 = vmatprep.subr.bf16.mxu0 0
    %64 = vmatpush1.bf16.msra.mxu0 0
    %65 = vmatprep.subr.bf16.mxu0 0
    %66 = vmatpush1.bf16.msra.mxu0 0
    %67 = vmatprep.subr.bf16.mxu0 0
    %68 = vmatpush1.bf16.msra.mxu0 0
    %69 = vmatprep.subr.bf16.mxu0 0
    %70 = vmatpush1.bf16.msra.mxu0 0
    %71 = vmatprep.subr.bf16.mxu0 0
    %72 = vmatpush1.bf16.msra.mxu0 0
    %73 = vmatprep.subr.bf16.mxu0 0
    %74 = vmatpush1.bf16.msra.mxu0 %v53
    %75 = vmatprep.subr.bf16.mxu0 0
    %76 = vmatpush2.bf16.msra.mxu0 0
    %77 = vmatprep.subr.bf16.mxu0 0
    %78 = vmatpush2.bf16.msra.mxu0 0
    %79 = vmatprep.subr.bf16.mxu0 0
    %80 = vmatpush2.bf16.msra.mxu0 0
    %81 = vmatprep.subr.bf16.mxu0 0
    %82 = vmatpush2.bf16.msra.mxu0 0
    %83 = vmatprep.subr.bf16.mxu0 0
    %84 = vmatpush2.bf16.msra.mxu0 0
    %85 = vmatprep.subr.bf16.mxu0 0
    %86 = vmatpush2.bf16.msra.mxu0 0
    %87 = vmatprep.subr.bf16.mxu0 0
    %88 = vmatpush2.bf16.msra.mxu0 0
    %89 = vmatprep.subr.bf16.mxu0 0
    %90 = vmatpush2.bf16.msra.mxu0 0
    %91 = vmatprep.mubr.bf16.mxu0 0
    %92 = vmatmul.mubr.bf16.gmra.mxu0 %v57
    %v93 = vpop.f32.mrf.mxu0
    %v94 = vadd.f32 %v48, %v93
    %v95 = vpop.f32.mrf.mxu0
    %v96 = vpop.f32.mrf.mxu0
    %v97 = vpop.f32.mrf.mxu0
    %98 = vdwg.mxu0
    %v99 = vmax.f32 %v94, 0.0
    %v100 = vld [vmem:[#allocation5 + $0x10] sm:$0xf]
    %v101 = vld [vmem:[#allocation5 + $0x14] sm:$0xf]
    %v102 = vld [vmem:[#allocation5 + $0x18] sm:$0xf]
    %v103 = vld [vmem:[#allocation5 + $0x1c] sm:$0xf]
    %v104 = vld [vmem:[#allocation5 + $0x20] sm:$0xf]
    %v105 = vld [vmem:[#allocation5 + $0x24] sm:$0xf]
    %v106 = vld [vmem:[#allocation5 + $0x28] sm:$0xf]
    %v107 = vld [vmem:[#allocation5 + $0x2c] sm:$0xf]
    %v108 = vld [vmem:[#allocation5 + $0x30] sm:$0xf]
    %v109 = vld [vmem:[#allocation5 + $0x34] sm:$0xf]
    %v110 = vld [vmem:[#allocation5 + $0x38] sm:$0xf]
    %v111 = vld [vmem:[#allocation5 + $0x3c] sm:$0xf]
    %v112 = vld [vmem:[#allocation5 + $0x40] sm:$0xf]
    %v113 = vld [vmem:[#allocation5 + $0x44] sm:$0xf]
    %v114 = vld [vmem:[#allocation5 + $0x48] sm:$0xf]
    %v115 = vld [vmem:[#allocation5 + $0x4c] sm:$0xf]
    %v116 = vld [vmem:[#allocation5 + $0x50] sm:$0x1]
    %v117 = vunpack.c.l.bf16 %v116
    %v118 = vpack.c.bf16 %v99, %v99
    %v119 = vlaneseq
    %v120 = vshrl.u32 %v119, 7
    %v121 = vsub.s32 0, %v120
    %v122 = vrot.slane %v117, %v121
    %v139 = vunpack.c.l.b16 %v100
    %v140 = vunpack.c.l.b16 %v101
    %v141 = vunpack.c.l.b16 %v102
    %v142 = vunpack.c.l.b16 %v103
    %v143 = vunpack.c.l.b16 %v104
    %v144 = vunpack.c.l.b16 %v105
    %v145 = vunpack.c.l.b16 %v106
    %v146 = vunpack.c.l.b16 %v107
    %v147 = vunpack.c.l.b16 %v108
    %v148 = vunpack.c.l.b16 %v109
    %v149 = vunpack.c.l.b16 %v110
    %v150 = vunpack.c.l.b16 %v111
    %v151 = vunpack.c.l.b16 %v112
    %v152 = vunpack.c.l.b16 %v113
    %v153 = vunpack.c.l.b16 %v114
    %v154 = vunpack.c.l.b16 %v115
    %v155 = vpack.c.b16 %v140, %v139
    %v156 = vpack.c.b16 %v142, %v141
    %v157 = vpack.c.b16 %v144, %v143
    %v158 = vpack.c.b16 %v146, %v145
    %v159 = vpack.c.b16 %v148, %v147
    %v160 = vpack.c.b16 %v150, %v149
    %v161 = vpack.c.b16 %v152, %v151
    %v162 = vpack.c.b16 %v154, %v153
    %171 = vmatprep.subr.bf16.mxu0 0
    %172 = vmatpush1.bf16.msra.mxu0 %v162
    %173 = vmatprep.subr.bf16.mxu0 0
    %174 = vmatpush1.bf16.msra.mxu0 %v161
    %175 = vmatprep.subr.bf16.mxu0 0
    %176 = vmatpush1.bf16.msra.mxu0 %v160
    %177 = vmatprep.subr.bf16.mxu0 0
    %178 = vmatpush1.bf16.msra.mxu0 %v159
    %179 = vmatprep.subr.bf16.mxu0 0
    %180 = vmatpush1.bf16.msra.mxu0 %v158
    %181 = vmatprep.subr.bf16.mxu0 0
    %182 = vmatpush1.bf16.msra.mxu0 %v157
    %183 = vmatprep.subr.bf16.mxu0 0
    %184 = vmatpush1.bf16.msra.mxu0 %v156
    %185 = vmatprep.subr.bf16.mxu0 0
    %186 = vmatpush1.bf16.msra.mxu0 %v155
    %187 = vmatprep.subr.bf16.mxu0 0
    %188 = vmatpush2.bf16.msra.mxu0 0
    %189 = vmatprep.subr.bf16.mxu0 0
    %190 = vmatpush2.bf16.msra.mxu0 0
    %191 = vmatprep.subr.bf16.mxu0 0
    %192 = vmatpush2.bf16.msra.mxu0 0
    %193 = vmatprep.subr.bf16.mxu0 0
    %194 = vmatpush2.bf16.msra.mxu0 0
    %195 = vmatprep.subr.bf16.mxu0 0
    %196 = vmatpush2.bf16.msra.mxu0 0
    %197 = vmatprep.subr.bf16.mxu0 0
    %198 = vmatpush2.bf16.msra.mxu0 0
    %199 = vmatprep.subr.bf16.mxu0 0
    %200 = vmatpush2.bf16.msra.mxu0 0
    %201 = vmatprep.subr.bf16.mxu0 0
    %202 = vmatpush2.bf16.msra.mxu0 0
    %203 = vmatprep.mubr.bf16.mxu0 0
    %204 = vmatmul.mubr.bf16.gmra.mxu0 %v118
    %v205 = vpop.f32.mrf.mxu0
    %v206 = vadd.f32 %v122, %v205
    %v207 = vpop.f32.mrf.mxu0
    %v208 = vpop.f32.mrf.mxu0
    %v209 = vpop.f32.mrf.mxu0
    %210 = vdwg.mxu0
    %v211 = vmax.f32 %v206, 0.0
    %v212 = vld [vmem:[#allocation5 + $0x58] sm:$0xf]
    %v213 = vld [vmem:[#allocation5 + $0x5c] sm:$0xf]
    %v214 = vld [vmem:[#allocation5 + $0x60] sm:$0xf]
    %v215 = vld [vmem:[#allocation5 + $0x64] sm:$0xf]
    %v216 = vld [vmem:[#allocation5 + $0x68] sm:$0xf]
    %v217 = vld [vmem:[#allocation5 + $0x6c] sm:$0xf]
    %v218 = vld [vmem:[#allocation5 + $0x70] sm:$0xf]
    %v219 = vld [vmem:[#allocation5 + $0x74] sm:$0xf]
    %v220 = vld [vmem:[#allocation5 + $0x78] sm:$0xf]
    %v221 = vld [vmem:[#allocation5 + $0x7c] sm:$0xf]
    %v222 = vld [vmem:[#allocation5 + $0x80] sm:$0xf]
    %v223 = vld [vmem:[#allocation5 + $0x84] sm:$0xf]
    %v224 = vld [vmem:[#allocation5 + $0x88] sm:$0xf]
    %v225 = vld [vmem:[#allocation5 + $0x8c] sm:$0xf]
    %v226 = vld [vmem:[#allocation5 + $0x90] sm:$0xf]
    %v227 = vld [vmem:[#allocation5 + $0x94] sm:$0xf]
    %v228 = vld [vmem:[#allocation5 + $0x98] sm:$0x1]
    %v229 = vunpack.c.l.bf16 %v228
    %v230 = vpack.c.bf16 %v211, %v211
    %v231 = vlaneseq
    %v232 = vshrl.u32 %v231, 7
    %v233 = vsub.s32 0, %v232
    %v234 = vrot.slane %v229, %v233
    %v251 = vunpack.c.l.b16 %v212
    %v252 = vunpack.c.l.b16 %v213
    %v253 = vunpack.c.l.b16 %v214
    %v254 = vunpack.c.l.b16 %v215
    %v255 = vunpack.c.l.b16 %v216
    %v256 = vunpack.c.l.b16 %v217
    %v257 = vunpack.c.l.b16 %v218
    %v258 = vunpack.c.l.b16 %v219
    %v259 = vunpack.c.l.b16 %v220
    %v260 = vunpack.c.l.b16 %v221
    %v261 = vunpack.c.l.b16 %v222
    %v262 = vunpack.c.l.b16 %v223
    %v263 = vunpack.c.l.b16 %v224
    %v264 = vunpack.c.l.b16 %v225
    %v265 = vunpack.c.l.b16 %v226
    %v266 = vunpack.c.l.b16 %v227
    %v267 = vpack.c.b16 %v252, %v251
    %v268 = vpack.c.b16 %v254, %v253
    %v269 = vpack.c.b16 %v256, %v255
    %v270 = vpack.c.b16 %v258, %v257
    %v271 = vpack.c.b16 %v260, %v259
    %v272 = vpack.c.b16 %v262, %v261
    %v273 = vpack.c.b16 %v264, %v263
    %v274 = vpack.c.b16 %v266, %v265
    %283 = vmatprep.subr.bf16.mxu0 0
    %284 = vmatpush1.bf16.msra.mxu0 %v274
    %285 = vmatprep.subr.bf16.mxu0 0
    %286 = vmatpush1.bf16.msra.mxu0 %v273
    %287 = vmatprep.subr.bf16.mxu0 0
    %288 = vmatpush1.bf16.msra.mxu0 %v272
    %289 = vmatprep.subr.bf16.mxu0 0
    %290 = vmatpush1.bf16.msra.mxu0 %v271
    %291 = vmatprep.subr.bf16.mxu0 0
    %292 = vmatpush1.bf16.msra.mxu0 %v270
    %293 = vmatprep.subr.bf16.mxu0 0
    %294 = vmatpush1.bf16.msra.mxu0 %v269
    %295 = vmatprep.subr.bf16.mxu0 0
    %296 = vmatpush1.bf16.msra.mxu0 %v268
    %297 = vmatprep.subr.bf16.mxu0 0
    %298 = vmatpush1.bf16.msra.mxu0 %v267
    %299 = vmatprep.subr.bf16.mxu0 0
    %300 = vmatpush2.bf16.msra.mxu0 0
    %301 = vmatprep.subr.bf16.mxu0 0
    %302 = vmatpush2.bf16.msra.mxu0 0
    %303 = vmatprep.subr.bf16.mxu0 0
    %304 = vmatpush2.bf16.msra.mxu0 0
    %305 = vmatprep.subr.bf16.mxu0 0
    %306 = vmatpush2.bf16.msra.mxu0 0
    %307 = vmatprep.subr.bf16.mxu0 0
    %308 = vmatpush2.bf16.msra.mxu0 0
    %309 = vmatprep.subr.bf16.mxu0 0
    %310 = vmatpush2.bf16.msra.mxu0 0
    %311 = vmatprep.subr.bf16.mxu0 0
    %312 = vmatpush2.bf16.msra.mxu0 0
    %313 = vmatprep.subr.bf16.mxu0 0
    %314 = vmatpush2.bf16.msra.mxu0 0
    %315 = vmatprep.mubr.bf16.mxu0 0
    %316 = vmatmul.mubr.bf16.gmra.mxu0 %v230
    %v317 = vpop.f32.mrf.mxu0
    %v318 = vadd.f32 %v234, %v317
    %v319 = vpop.f32.mrf.mxu0
    %v320 = vpop.f32.mrf.mxu0
    %v321 = vpop.f32.mrf.mxu0
    %322 = vdwg.mxu0
    %v323 = vlaneseq
    %v324 = vand.u32 %v323, 127
    %vm325 = vcmp.lt.s32.totalorder %v324, 8
    %v326 = vsel %vm325, %v318, 0.0
    %327 = vadd.xlane.f32.xlu0 %v326
    %v328 = vpop.xlane.xlu0 %327
    %v329 = vrot.slane %v328, 4
    %v330 = vadd.f32 %v328, %v329
    %v331 = vrot.slane %v330, 2
    %v332 = vadd.f32 %v330, %v331
    %v333 = vrot.slane %v332, 1
    %v334 = vadd.f32 %v332, %v333
    %s335 = vtos %v334
    %v336 = vrcp.pop 64.0
    %s337 = vtos %v336
    %s338 = smul.f32 %s335, %s337
    %340 = vset.pattern.permute.xlu0 8
    %341 = vperm.xlu0 %340, %v318
    %v342 = vpop.permute.xlu0 %341
    %v344 = vadd.f32 %v318, %v342
    %v345 = vstv %s338
    %v346 = vsub.f32 %v344, %v345
    %347 = vst [vmem:[#allocation7] sm:$0xff] %v346
    // Predicated region
    $region18: #{forward.1} parent=1 // pred_check
      _
    $region19: #{forward.1} parent=1 // pred_check_branch
      %349 = sbr.rel (0) target = $region21
    $region20: #{forward.1} parent=1 // pred_region
      %s351 = ssub.s32 128, 128
      %352 = vsyncadd [#allocation4], %s351
      %s354 = sshll.u32 [#allocation7], 4
      %s355 = int_to_ptr.vmem [resolvable:$true] %s354
      %357 = dma.vmem_to_hbm [thread:$0]  %s355, 128, %s2, [#allocation4]
    $region21: #{forward.1} parent=1 // pred_fallthru
      _
    // Predicated region
    $region22: #{forward.1} parent=1 // pred_check
      _
    $region23: #{forward.1} parent=1 // pred_check_branch
      %359 = sbr.rel (0) target = $region25
    $region24: #{forward.1} parent=1 // pred_region
      %360 = dma.done [#allocation4], 128
    $region25: #{forward.1} parent=1 // pred_fallthru
      _
    %361 = vsyncpa [#allocation3], 1
    %362 = vsyncpa [#allocation6], 1
    %363 = vsyncpa [#allocation4], 1

</llo_original>
